<compile_context>
chip_gen: v5e
topology: v5e:2x2
jax: 0.10.0
libtpu: 0.0.40
codegen_flags: <defaults>
</compile_context>

<pallas_src>
import functools

import jax
import jax.numpy as jnp
from jax.experimental import pallas as pl
from jax.experimental.pallas import tpu as pltpu


def _boundary_loss_kernel(logp1_ref, logp2_ref, gold_ref, out_ref, *, batch, tile_b):
    """Per-tile partial loss: out = -sum_b (logp1[b, g0[b]] + logp2[b, g1[b]])."""
    # logp*_ref: (tb, T) f32 VMEM; gold_ref: (tb, 2) i32 VMEM; out_ref: (1, 1) f32 SMEM
    i = pl.program_id(0)
    shape = logp1_ref.shape
    cols = jax.lax.broadcasted_iota(jnp.int32, shape, 1)                 # lane ids
    rows = jax.lax.broadcasted_iota(jnp.int32, shape, 0) + i * tile_b    # global row
    valid = rows < batch                                                 # ragged-tile mask

    g = gold_ref[...]                                                    # (tb, 2) i32
    g1 = g[:, 0:1]                                                       # (tb, 1)
    g2 = g[:, 1:2]                                                       # (tb, 1)

    # Select (not mask-multiply): avoids 0 * (-inf) = NaN when log_p has -inf
    # at non-gold positions; invalid (overhanging) rows contribute exactly 0
    # even if the padded block holds garbage.
    sel = jnp.where(valid & (cols == g1), logp1_ref[...], 0.0)
    sel = sel + jnp.where(valid & (cols == g2), logp2_ref[...], 0.0)
    out_ref[0, 0] = -jnp.sum(sel)


def boundary_loss(log_p1, log_p2, gold, *, tile_b=None,
                  vmem_budget_bytes=16 * 1024 * 1024):
    """NLL(sum)(log_p1, gold[:,0]) + NLL(sum)(log_p2, gold[:,1]) -> scalar f32."""
    B, T = log_p1.shape
    log_p1 = log_p1.astype(jnp.float32)
    log_p2 = log_p2.astype(jnp.float32)
    gold = gold.astype(jnp.int32)

    # Pick a batch tile so 2 inputs x 2 pipeline buffers x (tb * T * 4B) stays
    # under the VMEM budget (safe on v7x's smaller VMEM). Sublane-align to 8.
    if tile_b is None:
        max_tb = max(8, (vmem_budget_bytes // (16 * T)) // 8 * 8)
        tile_b = min(512, max_tb)
    tb = max(8, (int(tile_b) // 8) * 8)
    num_tiles = pl.cdiv(B, tb)

    bytes_accessed = 2 * B * T * 4 + B * 2 * 4 + num_tiles * 4
    cost = pl.CostEstimate(flops=4 * B * T, transcendentals=0,
                           bytes_accessed=bytes_accessed)

    # 2 log-prob inputs x 2 pipeline buffers + gold buffers + margin.
    needed_vmem = 16 * tb * T + 2 * tb * 128 * 4 + (2 << 20)
    vmem_limit = int(min(100 * (1 << 20), max(8 * (1 << 20), needed_vmem)))

    kernel = functools.partial(_boundary_loss_kernel, batch=B, tile_b=tb)

    partials = pl.pallas_call(
        kernel,
        out_shape=jax.ShapeDtypeStruct((num_tiles, 1), jnp.float32),
        grid_spec=pltpu.PrefetchScalarGridSpec(
            num_scalar_prefetch=0,
            grid=(num_tiles,),
            in_specs=[
                pl.BlockSpec((tb, T), lambda i: (i, 0)),  # log_p1 tile
                pl.BlockSpec((tb, T), lambda i: (i, 0)),  # log_p2 tile
                pl.BlockSpec((tb, 2), lambda i: (i, 0)),  # gold tile (both columns)
            ],
            out_specs=pl.BlockSpec((1, 1), lambda i: (i, 0),
                                   memory_space=pltpu.MemorySpace.SMEM),
        ),
        compiler_params=pltpu.CompilerParams(
            dimension_semantics=("parallel",),
            vmem_limit_bytes=vmem_limit,
        ),
        cost_estimate=cost,
    )(log_p1, log_p2, gold)

    return jnp.sum(partials)


# TODO(synk): pick_best_span / EM / F1 / sentence-level metrics operate on raw
# text and python dicts (host-side bookkeeping), not tensors — no Pallas
# equivalent; only the NLL loss is ported.


if __name__ == "__main__":
    key = jax.random.PRNGKey(0)

    def reference(lp1, lp2, g):
        b = lp1.shape[0]
        return (-jnp.sum(lp1[jnp.arange(b), g[:, 0]])
                - jnp.sum(lp2[jnp.arange(b), g[:, 1]]))

    # Small shape consistent with the module: batch=2, context length T=16.
    B, T = 2, 16
    k1, k2, k3 = jax.random.split(key, 3)
    logits1 = jax.random.normal(k1, (B, T), dtype=jnp.float32)
    logits2 = jax.random.normal(k2, (B, T), dtype=jnp.float32)
    log_p1 = jax.nn.log_softmax(logits1, axis=-1)
    log_p2 = jax.nn.log_softmax(logits2, axis=-1)
    gold = jax.random.randint(k3, (B, 2), 0, T, dtype=jnp.int32)

    loss = boundary_loss(log_p1, log_p2, gold)
    jax.block_until_ready(loss)
    ref = reference(log_p1, log_p2, gold)
    assert jnp.allclose(loss, ref, atol=1e-5, rtol=1e-5), (loss, ref)

    # Exercise the multi-tile (pipelined, ragged last tile) path.
    B2, T2 = 20, 16
    k4, k5, k6 = jax.random.split(jax.random.PRNGKey(1), 3)
    lp1 = jax.nn.log_softmax(jax.random.normal(k4, (B2, T2), jnp.float32), axis=-1)
    lp2 = jax.nn.log_softmax(jax.random.normal(k5, (B2, T2), jnp.float32), axis=-1)
    g2 = jax.random.randint(k6, (B2, 2), 0, T2, dtype=jnp.int32)
    loss2 = boundary_loss(lp1, lp2, g2, tile_b=8)   # 3 tiles, last tile ragged (4 rows)
    jax.block_until_ready(loss2)
    ref2 = reference(lp1, lp2, g2)
    assert jnp.allclose(loss2, ref2, atol=1e-5, rtol=1e-5), (loss2, ref2)

    print("KERNEL_OK")
</pallas_src>

<mosaic_0001>
module attributes {stable_mosaic.version = 11 : i64} {
  func.func @_boundary_loss_kernel(%arg0: i32, %arg1: memref<512x16xf32, #tpu.memory_space<vmem>>, %arg2: memref<512x16xf32, #tpu.memory_space<vmem>>, %arg3: memref<512x2xi32, #tpu.memory_space<vmem>>, %arg4: memref<1x1xf32, #tpu.memory_space<smem>>) attributes {dimension_semantics = [#tpu.dimension_semantics<parallel>], iteration_bounds = array<i64: 1>, scalar_prefetch = 0 : i64, scratch_operands = 0 : i64, tpu.core_type = #tpu.core_type<tc>, window_params = [{transform_indices = @transform_0, window_bounds = array<i64: 512, 16>}, {transform_indices = @transform_1, window_bounds = array<i64: 512, 16>}, {transform_indices = @transform_2, window_bounds = array<i64: 512, 2>}, {transform_indices = @transform_3, window_bounds = array<i64: 1, 1>}]} {
    %0 = tpu.iota {dimensions = array<i32: 1>} : vector<512x16xi32>
    %1 = tpu.iota {dimensions = array<i32: 0>} : vector<512x16xi32>
    %c512_i32 = arith.constant 512 : i32
    %2 = arith.muli %arg0, %c512_i32 : i32
    %3 = vector.broadcast %2 : i32 to vector<512x16xi32>
    %4 = arith.addi %1, %3 : vector<512x16xi32>
    %c2_i32 = arith.constant 2 : i32
    %5 = vector.broadcast %c2_i32 : i32 to vector<512x16xi32>
    %6 = arith.cmpi slt, %4, %5 : vector<512x16xi32>
    %c0 = arith.constant 0 : index
    %c0_0 = arith.constant 0 : index
    %7 = vector.load %arg3[%c0, %c0_0] : memref<512x2xi32, #tpu.memory_space<vmem>>, vector<512x2xi32>
    %8 = vector.extract_strided_slice %7 {offsets = [0, 0], sizes = [512, 1], strides = [1, 1]} : vector<512x2xi32> to vector<512x1xi32>
    %9 = vector.extract_strided_slice %7 {offsets = [0, 1], sizes = [512, 1], strides = [1, 1]} : vector<512x2xi32> to vector<512x1xi32>
    %10 = vector.broadcast %8 : vector<512x1xi32> to vector<512x16xi32>
    %11 = arith.cmpi eq, %0, %10 : vector<512x16xi32>
    %12 = arith.andi %6, %11 : vector<512x16xi1>
    %c0_1 = arith.constant 0 : index
    %c0_2 = arith.constant 0 : index
    %13 = vector.load %arg1[%c0_1, %c0_2] : memref<512x16xf32, #tpu.memory_space<vmem>>, vector<512x16xf32>
    %cst = arith.constant 0.000000e+00 : f32
    %14 = vector.broadcast %cst : f32 to vector<512x16xf32>
    %15 = arith.select %12, %13, %14 : vector<512x16xi1>, vector<512x16xf32>
    %16 = vector.broadcast %9 : vector<512x1xi32> to vector<512x16xi32>
    %17 = arith.cmpi eq, %0, %16 : vector<512x16xi32>
    %18 = arith.andi %6, %17 : vector<512x16xi1>
    %c0_3 = arith.constant 0 : index
    %c0_4 = arith.constant 0 : index
    %19 = vector.load %arg2[%c0_3, %c0_4] : memref<512x16xf32, #tpu.memory_space<vmem>>, vector<512x16xf32>
    %cst_5 = arith.constant 0.000000e+00 : f32
    %20 = vector.broadcast %cst_5 : f32 to vector<512x16xf32>
    %21 = arith.select %18, %19, %20 : vector<512x16xi1>, vector<512x16xf32>
    %22 = arith.addf %15, %21 : vector<512x16xf32>
    %23 = vector.shape_cast %22 : vector<512x16xf32> to vector<1x512x16xf32>
    %cst_6 = arith.constant dense<0.000000e+00> : vector<1xf32>
    %24 = vector.multi_reduction <add>, %23, %cst_6 [1, 2] : vector<1x512x16xf32> to vector<1xf32>
    %25 = vector.shape_cast %24 : vector<1xf32> to vector<1x1x1xf32>
    %26 = vector.extract %25[0, 0, 0] : f32 from vector<1x1x1xf32>
    %cst_7 = arith.constant 0.000000e+00 : f32
    %27 = arith.subf %cst_7, %26 : f32
    %c0_8 = arith.constant 0 : index
    %c0_9 = arith.constant 0 : index
    %28 = memref.load %arg4[%c0_8, %c0_9] : memref<1x1xf32, #tpu.memory_space<smem>>
    memref.store %27, %arg4[%c0_8, %c0_9] : memref<1x1xf32, #tpu.memory_space<smem>>
    return
  }
  func.func @transform_0(%arg0: i32) -> (i32, i32) {
    %c0_i32 = arith.constant 0 : i32
    %c0_i32_0 = arith.constant 0 : i32
    return %arg0, %c0_i32 : i32, i32
  }
  func.func @transform_1(%arg0: i32) -> (i32, i32) {
    %c0_i32 = arith.constant 0 : i32
    %c0_i32_0 = arith.constant 0 : i32
    return %arg0, %c0_i32 : i32, i32
  }
  func.func @transform_2(%arg0: i32) -> (i32, i32) {
    %c0_i32 = arith.constant 0 : i32
    %c0_i32_0 = arith.constant 0 : i32
    return %arg0, %c0_i32 : i32, i32
  }
  func.func @transform_3(%arg0: i32) -> (i32, i32) {
    %c0_i32 = arith.constant 0 : i32
    %c0_i32_0 = arith.constant 0 : i32
    return %arg0, %c0_i32 : i32, i32
  }
}

</mosaic_0001>

<llo_original>
// kernel: tpu_custom_call.1
$region0: #{tpu_custom_call.1}
  #allocation0 [shape = 'u32[]', space=smem, size = 0x4, offset = 0x4, fixed_abs, tag = 'smem constant byte address 0x4 - core index']
  #allocation1 [shape = 'u32[72,128]{1,0:T(1,128)}', space=vmem, size = 0x9000, scoped, tag = 'internal scratch']
  %s0 = inlined_call_operand.hbm [shape: f32[2,16], index: 0, kind: input, shape index: {}]
  %s1 = inlined_call_operand.hbm [shape: f32[2,16], index: 1, kind: input, shape index: {}]
  %s2 = inlined_call_operand.hbm [shape: s32[2,2], index: 2, kind: input, shape index: {}]
  %s3 = inlined_call_operand.hbm [shape: f32[1,1], index: 3, kind: output, shape index: {}]
  %s4 = sld [smem:[#allocation0]]
  $region34: #{tpu_custom_call.1} parent=0
    _
  %s6 = ssub.s32 1, %s4
  %s7 = scalar_select 0, %s6, %s4
  $region1: #{tpu_custom_call.1} parent=0
    #allocation2 [shape = 'u8[262144]{0}', space=vmem, size = 0x40000, scoped, tag = 'input window, operand 0, single buffered']
    #allocation3 [shape = 's32[1]{0}', space=sflag, size = 0x4, scoped, tag = 'scoped memory for tpu_custom_call.1']
    #allocation4 [shape = 's32[1]{0}', space=sflag, size = 0x4, scoped, tag = 'scoped memory for tpu_custom_call.1']
    #allocation5 [shape = 'u8[262144]{0}', space=vmem, size = 0x40000, scoped, tag = 'input window, operand 1, single buffered']
    #allocation6 [shape = 's32[1]{0}', space=sflag, size = 0x4, scoped, tag = 'scoped memory for tpu_custom_call.1']
    #allocation7 [shape = 'u8[262144]{0}', space=vmem, size = 0x40000, scoped, tag = 'input window, operand 2, single buffered']
    #allocation8 [shape = 'u8[512]{0}', space=smem, size = 0x200, scoped, tag = 'output window, operand 0, single buffered']
    %8 = vsyncpa [#allocation3], 0
    %9 = vsyncpa [#allocation6], 0
    %10 = vsyncpa [#allocation4], 0
    // Predicated region
    $region2: #{tpu_custom_call.1} parent=1 // pred_check
      _
    $region3: #{tpu_custom_call.1} parent=1 // pred_check_branch
      %12 = sbr.rel (0) target = $region5
    $region4: #{tpu_custom_call.1} parent=1 // pred_region
      %14 = vsyncadd [#allocation3], 8160
      %s15 = sshll.u32 %s0, 4
      %s16 = int_to_ptr.hbm [resolvable:$true] %s15
      %s17 = sshll.u32 [#allocation2], 4
      %s18 = int_to_ptr.vmem [resolvable:$true] %s17
      %23 = dma.hbm_to_vmem [thread:$0]  %s16, 32, %s18, [#allocation3], 32, 32, 2
    $region5: #{tpu_custom_call.1} parent=1 // pred_fallthru
      _
    // Predicated region
    $region6: #{tpu_custom_call.1} parent=1 // pred_check
      _
    $region7: #{tpu_custom_call.1} parent=1 // pred_check_branch
      %25 = sbr.rel (0) target = $region9
    $region8: #{tpu_custom_call.1} parent=1 // pred_region
      %27 = vsyncadd [#allocation6], 8160
      %s28 = sshll.u32 %s1, 4
      %s29 = int_to_ptr.hbm [resolvable:$true] %s28
      %s30 = sshll.u32 [#allocation5], 4
      %s31 = int_to_ptr.vmem [resolvable:$true] %s30
      %36 = dma.hbm_to_vmem [thread:$0]  %s29, 32, %s31, [#allocation6], 32, 32, 2
    $region9: #{tpu_custom_call.1} parent=1 // pred_fallthru
      _
    // Predicated region
    $region10: #{tpu_custom_call.1} parent=1 // pred_check
      _
    $region11: #{tpu_custom_call.1} parent=1 // pred_check_branch
      %38 = sbr.rel (0) target = $region13
    $region12: #{tpu_custom_call.1} parent=1 // pred_region
      %40 = vsyncadd [#allocation6], 8160
      %s41 = sshll.u32 %s2, 4
      %s42 = int_to_ptr.hbm [resolvable:$true] %s41
      %s43 = sshll.u32 [#allocation7], 4
      %s44 = int_to_ptr.vmem [resolvable:$true] %s43
      %49 = dma.hbm_to_vmem [thread:$0]  %s42, 32, %s44, [#allocation6], 32, 32, 2
    $region13: #{tpu_custom_call.1} parent=1 // pred_fallthru
      _
    // Predicated region
    $region14: #{tpu_custom_call.1} parent=1 // pred_check
      _
    $region15: #{tpu_custom_call.1} parent=1 // pred_check_branch
      %51 = sbr.rel (0) target = $region17
    $region16: #{tpu_custom_call.1} parent=1 // pred_region
      %53 = dma.done [#allocation3], 8192
    $region17: #{tpu_custom_call.1} parent=1 // pred_fallthru
      _
    // Predicated region
    $region18: #{tpu_custom_call.1} parent=1 // pred_check
      _
    $region19: #{tpu_custom_call.1} parent=1 // pred_check_branch
      %55 = sbr.rel (0) target = $region21
    $region20: #{tpu_custom_call.1} parent=1 // pred_region
      %57 = dma.done [#allocation6], 8192
    $region21: #{tpu_custom_call.1} parent=1 // pred_fallthru
      _
    // Predicated region
    $region22: #{tpu_custom_call.1} parent=1 // pred_check
      _
    $region23: #{tpu_custom_call.1} parent=1 // pred_check_branch
      %59 = sbr.rel (0) target = $region25
    $region24: #{tpu_custom_call.1} parent=1 // pred_region
      %61 = dma.done [#allocation6], 8192
    $region25: #{tpu_custom_call.1} parent=1 // pred_fallthru
      _
    %v62 = vlaneseq
    %v63 = vand.u32 %v62, 127
    %v64 = vlaneseq
    %v65 = vshrl.u32 %v64, 7
    %v66 = vadd.s32 %v65, 8
    %v67 = vadd.s32 %v65, 16
    %v68 = vadd.s32 %v65, 24
    %v69 = vadd.s32 %v65, 32
    %v70 = vadd.s32 %v65, 40
    %v71 = vadd.s32 %v65, 48
    %v72 = vadd.s32 %v65, 56
    %v73 = vadd.s32 %v65, 64
    %v74 = vadd.s32 %v65, 72
    %v75 = vadd.s32 %v65, 80
    %v76 = vadd.s32 %v65, 88
    %v77 = vadd.s32 %v65, 96
    %v78 = vadd.s32 %v65, 104
    %v79 = vadd.s32 %v65, 112
    %v80 = vadd.s32 %v65, 120
    %v81 = vadd.s32 %v65, 128
    %v82 = vadd.s32 %v65, 136
    %v83 = vadd.s32 %v65, 144
    %v84 = vadd.s32 %v65, 152
    %v85 = vadd.s32 %v65, 160
    %v86 = vadd.s32 %v65, 168
    %v87 = vadd.s32 %v65, 176
    %v88 = vadd.s32 %v65, 184
    %v89 = vadd.s32 %v65, 192
    %v90 = vadd.s32 %v65, 200
    %v91 = vadd.s32 %v65, 208
    %v92 = vadd.s32 %v65, 216
    %v93 = vadd.s32 %v65, 224
    %v94 = vadd.s32 %v65, 232
    %v95 = vadd.s32 %v65, 240
    %v96 = vadd.s32 %v65, 248
    %v97 = vadd.s32 %v65, 256
    %v98 = vadd.s32 %v65, 264
    %v99 = vadd.s32 %v65, 272
    %v100 = vadd.s32 %v65, 280
    %v101 = vadd.s32 %v65, 288
    %v102 = vadd.s32 %v65, 296
    %v103 = vadd.s32 %v65, 304
    %v104 = vadd.s32 %v65, 312
    %v105 = vadd.s32 %v65, 320
    %v106 = vadd.s32 %v65, 328
    %v107 = vadd.s32 %v65, 336
    %v108 = vadd.s32 %v65, 344
    %v109 = vadd.s32 %v65, 352
    %v110 = vadd.s32 %v65, 360
    %v111 = vadd.s32 %v65, 368
    %v112 = vadd.s32 %v65, 376
    %v113 = vadd.s32 %v65, 384
    %v114 = vadd.s32 %v65, 392
    %v115 = vadd.s32 %v65, 400
    %v116 = vadd.s32 %v65, 408
    %v117 = vadd.s32 %v65, 416
    %v118 = vadd.s32 %v65, 424
    %v119 = vadd.s32 %v65, 432
    %v120 = vadd.s32 %v65, 440
    %v121 = vadd.s32 %v65, 448
    %v122 = vadd.s32 %v65, 456
    %v123 = vadd.s32 %v65, 464
    %v124 = vadd.s32 %v65, 472
    %v125 = vadd.s32 %v65, 480
    %v126 = vadd.s32 %v65, 488
    %v127 = vadd.s32 %v65, 496
    %v128 = vadd.s32 %v65, 504
    %s129 = smul.u32 0, 512
    %v130 = vstv %s129
    %v131 = vadd.s32 %v65, %v130
    %v132 = vadd.s32 %v66, %v130
    %v133 = vadd.s32 %v67, %v130
    %v134 = vadd.s32 %v68, %v130
    %v135 = vadd.s32 %v69, %v130
    %v136 = vadd.s32 %v70, %v130
    %v137 = vadd.s32 %v71, %v130
    %v138 = vadd.s32 %v72, %v130
    %v139 = vadd.s32 %v73, %v130
    %v140 = vadd.s32 %v74, %v130
    %v141 = vadd.s32 %v75, %v130
    %v142 = vadd.s32 %v76, %v130
    %v143 = vadd.s32 %v77, %v130
    %v144 = vadd.s32 %v78, %v130
    %v145 = vadd.s32 %v79, %v130
    %v146 = vadd.s32 %v80, %v130
    %v147 = vadd.s32 %v81, %v130
    %v148 = vadd.s32 %v82, %v130
    %v149 = vadd.s32 %v83, %v130
    %v150 = vadd.s32 %v84, %v130
    %v151 = vadd.s32 %v85, %v130
    %v152 = vadd.s32 %v86, %v130
    %v153 = vadd.s32 %v87, %v130
    %v154 = vadd.s32 %v88, %v130
    %v155 = vadd.s32 %v89, %v130
    %v156 = vadd.s32 %v90, %v130
    %v157 = vadd.s32 %v91, %v130
    %v158 = vadd.s32 %v92, %v130
    %v159 = vadd.s32 %v93, %v130
    %v160 = vadd.s32 %v94, %v130
    %v161 = vadd.s32 %v95, %v130
    %v162 = vadd.s32 %v96, %v130
    %v163 = vadd.s32 %v97, %v130
    %v164 = vadd.s32 %v98, %v130
    %v165 = vadd.s32 %v99, %v130
    %v166 = vadd.s32 %v100, %v130
    %v167 = vadd.s32 %v101, %v130
    %v168 = vadd.s32 %v102, %v130
    %v169 = vadd.s32 %v103, %v130
    %v170 = vadd.s32 %v104, %v130
    %v171 = vadd.s32 %v105, %v130
    %v172 = vadd.s32 %v106, %v130
    %v173 = vadd.s32 %v107, %v130
    %v174 = vadd.s32 %v108, %v130
    %v175 = vadd.s32 %v109, %v130
    %v176 = vadd.s32 %v110, %v130
    %v177 = vadd.s32 %v111, %v130
    %v178 = vadd.s32 %v112, %v130
    %v179 = vadd.s32 %v113, %v130
    %v180 = vadd.s32 %v114, %v130
    %v181 = vadd.s32 %v115, %v130
    %v182 = vadd.s32 %v116, %v130
    %v183 = vadd.s32 %v117, %v130
    %v184 = vadd.s32 %v118, %v130
    %v185 = vadd.s32 %v119, %v130
    %v186 = vadd.s32 %v120, %v130
    %v187 = vadd.s32 %v121, %v130
    %v188 = vadd.s32 %v122, %v130
    %v189 = vadd.s32 %v123, %v130
    %v190 = vadd.s32 %v124, %v130
    %v191 = vadd.s32 %v125, %v130
    %v192 = vadd.s32 %v126, %v130
    %v193 = vadd.s32 %v127, %v130
    %v194 = vadd.s32 %v128, %v130
    %vm195 = vcmp.lt.s32.totalorder %v131, 2
    %vm196 = vcmp.lt.s32.totalorder %v132, 2
    %vm197 = vcmp.lt.s32.totalorder %v133, 2
    %vm198 = vcmp.lt.s32.totalorder %v134, 2
    %vm199 = vcmp.lt.s32.totalorder %v135, 2
    %vm200 = vcmp.lt.s32.totalorder %v136, 2
    %vm201 = vcmp.lt.s32.totalorder %v137, 2
    %vm202 = vcmp.lt.s32.totalorder %v138, 2
    %vm203 = vcmp.lt.s32.totalorder %v139, 2
    %vm204 = vcmp.lt.s32.totalorder %v140, 2
    %vm205 = vcmp.lt.s32.totalorder %v141, 2
    %vm206 = vcmp.lt.s32.totalorder %v142, 2
    %vm207 = vcmp.lt.s32.totalorder %v143, 2
    %vm208 = vcmp.lt.s32.totalorder %v144, 2
    %vm209 = vcmp.lt.s32.totalorder %v145, 2
    %vm210 = vcmp.lt.s32.totalorder %v146, 2
    %vm211 = vcmp.lt.s32.totalorder %v147, 2
    %vm212 = vcmp.lt.s32.totalorder %v148, 2
    %vm213 = vcmp.lt.s32.totalorder %v149, 2
    %vm214 = vcmp.lt.s32.totalorder %v150, 2
    %vm215 = vcmp.lt.s32.totalorder %v151, 2
    %vm216 = vcmp.lt.s32.totalorder %v152, 2
    %vm217 = vcmp.lt.s32.totalorder %v153, 2
    %vm218 = vcmp.lt.s32.totalorder %v154, 2
    %vm219 = vcmp.lt.s32.totalorder %v155, 2
    %vm220 = vcmp.lt.s32.totalorder %v156, 2
    %vm221 = vcmp.lt.s32.totalorder %v157, 2
    %vm222 = vcmp.lt.s32.totalorder %v158, 2
    %vm223 = vcmp.lt.s32.totalorder %v159, 2
    %vm224 = vcmp.lt.s32.totalorder %v160, 2
    %vm225 = vcmp.lt.s32.totalorder %v161, 2
    %vm226 = vcmp.lt.s32.totalorder %v162, 2
    %vm227 = vcmp.lt.s32.totalorder %v163, 2
    %vm228 = vcmp.lt.s32.totalorder %v164, 2
    %vm229 = vcmp.lt.s32.totalorder %v165, 2
    %vm230 = vcmp.lt.s32.totalorder %v166, 2
    %vm231 = vcmp.lt.s32.totalorder %v167, 2
    %vm232 = vcmp.lt.s32.totalorder %v168, 2
    %vm233 = vcmp.lt.s32.totalorder %v169, 2
    %vm234 = vcmp.lt.s32.totalorder %v170, 2
    %vm235 = vcmp.lt.s32.totalorder %v171, 2
    %vm236 = vcmp.lt.s32.totalorder %v172, 2
    %vm237 = vcmp.lt.s32.totalorder %v173, 2
    %vm238 = vcmp.lt.s32.totalorder %v174, 2
    %vm239 = vcmp.lt.s32.totalorder %v175, 2
    %vm240 = vcmp.lt.s32.totalorder %v176, 2
    %vm241 = vcmp.lt.s32.totalorder %v177, 2
    %vm242 = vcmp.lt.s32.totalorder %v178, 2
    %vm243 = vcmp.lt.s32.totalorder %v179, 2
    %vm244 = vcmp.lt.s32.totalorder %v180, 2
    %vm245 = vcmp.lt.s32.totalorder %v181, 2
    %vm246 = vcmp.lt.s32.totalorder %v182, 2
    %vm247 = vcmp.lt.s32.totalorder %v183, 2
    %vm248 = vcmp.lt.s32.totalorder %v184, 2
    %vm249 = vcmp.lt.s32.totalorder %v185, 2
    %vm250 = vcmp.lt.s32.totalorder %v186, 2
    %vm251 = vcmp.lt.s32.totalorder %v187, 2
    %vm252 = vcmp.lt.s32.totalorder %v188, 2
    %vm253 = vcmp.lt.s32.totalorder %v189, 2
    %vm254 = vcmp.lt.s32.totalorder %v190, 2
    %vm255 = vcmp.lt.s32.totalorder %v191, 2
    %vm256 = vcmp.lt.s32.totalorder %v192, 2
    %vm257 = vcmp.lt.s32.totalorder %v193, 2
    %vm258 = vcmp.lt.s32.totalorder %v194, 2
    %v259 = vld [vmem:[#allocation7] sm:$0xff]
    %v260 = vld [vmem:[#allocation7 + $0x8] sm:$0xff]
    %v261 = vld [vmem:[#allocation7 + $0x10] sm:$0xff]
    %v262 = vld [vmem:[#allocation7 + $0x18] sm:$0xff]
    %v263 = vld [vmem:[#allocation7 + $0x20] sm:$0xff]
    %v264 = vld [vmem:[#allocation7 + $0x28] sm:$0xff]
    %v265 = vld [vmem:[#allocation7 + $0x30] sm:$0xff]
    %v266 = vld [vmem:[#allocation7 + $0x38] sm:$0xff]
    %v267 = vld [vmem:[#allocation7 + $0x40] sm:$0xff]
    %v268 = vld [vmem:[#allocation7 + $0x48] sm:$0xff]
    %v269 = vld [vmem:[#allocation7 + $0x50] sm:$0xff]
    %v270 = vld [vmem:[#allocation7 + $0x58] sm:$0xff]
    %v271 = vld [vmem:[#allocation7 + $0x60] sm:$0xff]
    %v272 = vld [vmem:[#allocation7 + $0x68] sm:$0xff]
    %v273 = vld [vmem:[#allocation7 + $0x70] sm:$0xff]
    %v274 = vld [vmem:[#allocation7 + $0x78] sm:$0xff]
    %v275 = vld [vmem:[#allocation7 + $0x80] sm:$0xff]
    %v276 = vld [vmem:[#allocation7 + $0x88] sm:$0xff]
    %v277 = vld [vmem:[#allocation7 + $0x90] sm:$0xff]
    %v278 = vld [vmem:[#allocation7 + $0x98] sm:$0xff]
    %v279 = vld [vmem:[#allocation7 + $0xa0] sm:$0xff]
    %v280 = vld [vmem:[#allocation7 + $0xa8] sm:$0xff]
    %v281 = vld [vmem:[#allocation7 + $0xb0] sm:$0xff]
    %v282 = vld [vmem:[#allocation7 + $0xb8] sm:$0xff]
    %v283 = vld [vmem:[#allocation7 + $0xc0] sm:$0xff]
    %v284 = vld [vmem:[#allocation7 + $0xc8] sm:$0xff]
    %v285 = vld [vmem:[#allocation7 + $0xd0] sm:$0xff]
    %v286 = vld [vmem:[#allocation7 + $0xd8] sm:$0xff]
    %v287 = vld [vmem:[#allocation7 + $0xe0] sm:$0xff]
    %v288 = vld [vmem:[#allocation7 + $0xe8] sm:$0xff]
    %v289 = vld [vmem:[#allocation7 + $0xf0] sm:$0xff]
    %v290 = vld [vmem:[#allocation7 + $0xf8] sm:$0xff]
    %v291 = vld [vmem:[#allocation7 + $0x100] sm:$0xff]
    %v292 = vld [vmem:[#allocation7 + $0x108] sm:$0xff]
    %v293 = vld [vmem:[#allocation7 + $0x110] sm:$0xff]
    %v294 = vld [vmem:[#allocation7 + $0x118] sm:$0xff]
    %v295 = vld [vmem:[#allocation7 + $0x120] sm:$0xff]
    %v296 = vld [vmem:[#allocation7 + $0x128] sm:$0xff]
    %v297 = vld [vmem:[#allocation7 + $0x130] sm:$0xff]
    %v298 = vld [vmem:[#allocation7 + $0x138] sm:$0xff]
    %v299 = vld [vmem:[#allocation7 + $0x140] sm:$0xff]
    %v300 = vld [vmem:[#allocation7 + $0x148] sm:$0xff]
    %v301 = vld [vmem:[#allocation7 + $0x150] sm:$0xff]
    %v302 = vld [vmem:[#allocation7 + $0x158] sm:$0xff]
    %v303 = vld [vmem:[#allocation7 + $0x160] sm:$0xff]
    %v304 = vld [vmem:[#allocation7 + $0x168] sm:$0xff]
    %v305 = vld [vmem:[#allocation7 + $0x170] sm:$0xff]
    %v306 = vld [vmem:[#allocation7 + $0x178] sm:$0xff]
    %v307 = vld [vmem:[#allocation7 + $0x180] sm:$0xff]
    %v308 = vld [vmem:[#allocation7 + $0x188] sm:$0xff]
    %v309 = vld [vmem:[#allocation7 + $0x190] sm:$0xff]
    %v310 = vld [vmem:[#allocation7 + $0x198] sm:$0xff]
    %v311 = vld [vmem:[#allocation7 + $0x1a0] sm:$0xff]
    %v312 = vld [vmem:[#allocation7 + $0x1a8] sm:$0xff]
    %v313 = vld [vmem:[#allocation7 + $0x1b0] sm:$0xff]
    %v314 = vld [vmem:[#allocation7 + $0x1b8] sm:$0xff]
    %v315 = vld [vmem:[#allocation7 + $0x1c0] sm:$0xff]
    %v316 = vld [vmem:[#allocation7 + $0x1c8] sm:$0xff]
    %v317 = vld [vmem:[#allocation7 + $0x1d0] sm:$0xff]
    %v318 = vld [vmem:[#allocation7 + $0x1d8] sm:$0xff]
    %v319 = vld [vmem:[#allocation7 + $0x1e0] sm:$0xff]
    %v320 = vld [vmem:[#allocation7 + $0x1e8] sm:$0xff]
    %v321 = vld [vmem:[#allocation7 + $0x1f0] sm:$0xff]
    %v322 = vld [vmem:[#allocation7 + $0x1f8] sm:$0xff]
    %323 = vset.pattern.permute.xlu0 0
    %324 = vperm.xlu0 %323, %v259
    %v325 = vpop.permute.xlu0 %324
    %326 = vset.pattern.permute.xlu0 0
    %327 = vperm.xlu0 %326, %v260
    %v328 = vpop.permute.xlu0 %327
    %329 = vset.pattern.permute.xlu0 0
    %330 = vperm.xlu0 %329, %v261
    %v331 = vpop.permute.xlu0 %330
    %332 = vset.pattern.permute.xlu0 0
    %333 = vperm.xlu0 %332, %v262
    %v334 = vpop.permute.xlu0 %333
    %335 = vset.pattern.permute.xlu0 0
    %336 = vperm.xlu0 %335, %v263
    %v337 = vpop.permute.xlu0 %336
    %338 = vset.pattern.permute.xlu0 0
    %339 = vperm.xlu0 %338, %v264
    %v340 = vpop.permute.xlu0 %339
    %341 = vset.pattern.permute.xlu0 0
    %342 = vperm.xlu0 %341, %v265
    %v343 = vpop.permute.xlu0 %342
    %344 = vset.pattern.permute.xlu0 0
    %345 = vperm.xlu0 %344, %v266
    %v346 = vpop.permute.xlu0 %345
    %347 = vset.pattern.permute.xlu0 0
    %348 = vperm.xlu0 %347, %v267
    %v349 = vpop.permute.xlu0 %348
    %350 = vset.pattern.permute.xlu0 0
    %351 = vperm.xlu0 %350, %v268
    %v352 = vpop.permute.xlu0 %351
    %353 = vset.pattern.permute.xlu0 0
    %354 = vperm.xlu0 %353, %v269
    %v355 = vpop.permute.xlu0 %354
    %356 = vset.pattern.permute.xlu0 0
    %357 = vperm.xlu0 %356, %v270
    %v358 = vpop.permute.xlu0 %357
    %359 = vset.pattern.permute.xlu0 0
    %360 = vperm.xlu0 %359, %v271
    %v361 = vpop.permute.xlu0 %360
    %362 = vset.pattern.permute.xlu0 0
    %363 = vperm.xlu0 %362, %v272
    %v364 = vpop.permute.xlu0 %363
    %365 = vset.pattern.permute.xlu0 0
    %366 = vperm.xlu0 %365, %v273
    %v367 = vpop.permute.xlu0 %366
    %368 = vset.pattern.permute.xlu0 0
    %369 = vperm.xlu0 %368, %v274
    %v370 = vpop.permute.xlu0 %369
    %371 = vset.pattern.permute.xlu0 0
    %372 = vperm.xlu0 %371, %v275
    %v373 = vpop.permute.xlu0 %372
    %374 = vset.pattern.permute.xlu0 0
    %375 = vperm.xlu0 %374, %v276
    %v376 = vpop.permute.xlu0 %375
    %377 = vset.pattern.permute.xlu0 0
    %378 = vperm.xlu0 %377, %v277
    %v379 = vpop.permute.xlu0 %378
    %380 = vset.pattern.permute.xlu0 0
    %381 = vperm.xlu0 %380, %v278
    %v382 = vpop.permute.xlu0 %381
    %383 = vset.pattern.permute.xlu0 0
    %384 = vperm.xlu0 %383, %v279
    %v385 = vpop.permute.xlu0 %384
    %386 = vset.pattern.permute.xlu0 0
    %387 = vperm.xlu0 %386, %v280
    %v388 = vpop.permute.xlu0 %387
    %389 = vset.pattern.permute.xlu0 0
    %390 = vperm.xlu0 %389, %v281
    %v391 = vpop.permute.xlu0 %390
    %392 = vset.pattern.permute.xlu0 0
    %393 = vperm.xlu0 %392, %v282
    %v394 = vpop.permute.xlu0 %393
    %395 = vset.pattern.permute.xlu0 0
    %396 = vperm.xlu0 %395, %v283
    %v397 = vpop.permute.xlu0 %396
    %398 = vset.pattern.permute.xlu0 0
    %399 = vperm.xlu0 %398, %v284
    %v400 = vpop.permute.xlu0 %399
    %401 = vset.pattern.permute.xlu0 0
    %402 = vperm.xlu0 %401, %v285
    %v403 = vpop.permute.xlu0 %402
    %404 = vset.pattern.permute.xlu0 0
    %405 = vperm.xlu0 %404, %v286
    %v406 = vpop.permute.xlu0 %405
    %407 = vset.pattern.permute.xlu0 0
    %408 = vperm.xlu0 %407, %v287
    %v409 = vpop.permute.xlu0 %408
    %410 = vset.pattern.permute.xlu0 0
    %411 = vperm.xlu0 %410, %v288
    %v412 = vpop.permute.xlu0 %411
    %413 = vset.pattern.permute.xlu0 0
    %414 = vperm.xlu0 %413, %v289
    %v415 = vpop.permute.xlu0 %414
    %416 = vset.pattern.permute.xlu0 0
    %417 = vperm.xlu0 %416, %v290
    %v418 = vpop.permute.xlu0 %417
    %419 = vset.pattern.permute.xlu0 0
    %420 = vperm.xlu0 %419, %v291
    %v421 = vpop.permute.xlu0 %420
    %422 = vset.pattern.permute.xlu0 0
    %423 = vperm.xlu0 %422, %v292
    %v424 = vpop.permute.xlu0 %423
    %425 = vset.pattern.permute.xlu0 0
    %426 = vperm.xlu0 %425, %v293
    %v427 = vpop.permute.xlu0 %426
    %428 = vset.pattern.permute.xlu0 0
    %429 = vperm.xlu0 %428, %v294
    %v430 = vpop.permute.xlu0 %429
    %431 = vset.pattern.permute.xlu0 0
    %432 = vperm.xlu0 %431, %v295
    %v433 = vpop.permute.xlu0 %432
    %434 = vset.pattern.permute.xlu0 0
    %435 = vperm.xlu0 %434, %v296
    %v436 = vpop.permute.xlu0 %435
    %437 = vset.pattern.permute.xlu0 0
    %438 = vperm.xlu0 %437, %v297
    %v439 = vpop.permute.xlu0 %438
    %440 = vset.pattern.permute.xlu0 0
    %441 = vperm.xlu0 %440, %v298
    %v442 = vpop.permute.xlu0 %441
    %443 = vset.pattern.permute.xlu0 0
    %444 = vperm.xlu0 %443, %v299
    %v445 = vpop.permute.xlu0 %444
    %446 = vset.pattern.permute.xlu0 0
    %447 = vperm.xlu0 %446, %v300
    %v448 = vpop.permute.xlu0 %447
    %449 = vset.pattern.permute.xlu0 0
    %450 = vperm.xlu0 %449, %v301
    %v451 = vpop.permute.xlu0 %450
    %452 = vset.pattern.permute.xlu0 0
    %453 = vperm.xlu0 %452, %v302
    %v454 = vpop.permute.xlu0 %453
    %455 = vset.pattern.permute.xlu0 0
    %456 = vperm.xlu0 %455, %v303
    %v457 = vpop.permute.xlu0 %456
    %458 = vset.pattern.permute.xlu0 0
    %459 = vperm.xlu0 %458, %v304
    %v460 = vpop.permute.xlu0 %459
    %461 = vset.pattern.permute.xlu0 0
    %462 = vperm.xlu0 %461, %v305
    %v463 = vpop.permute.xlu0 %462
    %464 = vset.pattern.permute.xlu0 0
    %465 = vperm.xlu0 %464, %v306
    %v466 = vpop.permute.xlu0 %465
    %467 = vset.pattern.permute.xlu0 0
    %468 = vperm.xlu0 %467, %v307
    %v469 = vpop.permute.xlu0 %468
    %470 = vset.pattern.permute.xlu0 0
    %471 = vperm.xlu0 %470, %v308
    %v472 = vpop.permute.xlu0 %471
    %473 = vset.pattern.permute.xlu0 0
    %474 = vperm.xlu0 %473, %v309
    %v475 = vpop.permute.xlu0 %474
    %476 = vset.pattern.permute.xlu0 0
    %477 = vperm.xlu0 %476, %v310
    %v478 = vpop.permute.xlu0 %477
    %479 = vset.pattern.permute.xlu0 0
    %480 = vperm.xlu0 %479, %v311
    %v481 = vpop.permute.xlu0 %480
    %482 = vset.pattern.permute.xlu0 0
    %483 = vperm.xlu0 %482, %v312
    %v484 = vpop.permute.xlu0 %483
    %485 = vset.pattern.permute.xlu0 0
    %486 = vperm.xlu0 %485, %v313
    %v487 = vpop.permute.xlu0 %486
    %488 = vset.pattern.permute.xlu0 0
    %489 = vperm.xlu0 %488, %v314
    %v490 = vpop.permute.xlu0 %489
    %491 = vset.pattern.permute.xlu0 0
    %492 = vperm.xlu0 %491, %v315
    %v493 = vpop.permute.xlu0 %492
    %494 = vset.pattern.permute.xlu0 0
    %495 = vperm.xlu0 %494, %v316
    %v496 = vpop.permute.xlu0 %495
    %497 = vset.pattern.permute.xlu0 0
    %498 = vperm.xlu0 %497, %v317
    %v499 = vpop.permute.xlu0 %498
    %500 = vset.pattern.permute.xlu0 0
    %501 = vperm.xlu0 %500, %v318
    %v502 = vpop.permute.xlu0 %501
    %503 = vset.pattern.permute.xlu0 0
    %504 = vperm.xlu0 %503, %v319
    %v505 = vpop.permute.xlu0 %504
    %506 = vset.pattern.permute.xlu0 0
    %507 = vperm.xlu0 %506, %v320
    %v508 = vpop.permute.xlu0 %507
    %509 = vset.pattern.permute.xlu0 0
    %510 = vperm.xlu0 %509, %v321
    %v511 = vpop.permute.xlu0 %510
    %512 = vset.pattern.permute.xlu0 0
    %513 = vperm.xlu0 %512, %v322
    %v514 = vpop.permute.xlu0 %513
    %vm515 = vcmp.eq.s32.totalorder %v63, %v325
    %vm516 = vcmp.eq.s32.totalorder %v63, %v328
    %vm517 = vcmp.eq.s32.totalorder %v63, %v331
    %vm518 = vcmp.eq.s32.totalorder %v63, %v334
    %vm519 = vcmp.eq.s32.totalorder %v63, %v337
    %vm520 = vcmp.eq.s32.totalorder %v63, %v340
    %vm521 = vcmp.eq.s32.totalorder %v63, %v343
    %vm522 = vcmp.eq.s32.totalorder %v63, %v346
    %vm523 = vcmp.eq.s32.totalorder %v63, %v349
    %vm524 = vcmp.eq.s32.totalorder %v63, %v352
    %vm525 = vcmp.eq.s32.totalorder %v63, %v355
    %vm526 = vcmp.eq.s32.totalorder %v63, %v358
    %vm527 = vcmp.eq.s32.totalorder %v63, %v361
    %vm528 = vcmp.eq.s32.totalorder %v63, %v364
    %vm529 = vcmp.eq.s32.totalorder %v63, %v367
    %vm530 = vcmp.eq.s32.totalorder %v63, %v370
    %vm531 = vcmp.eq.s32.totalorder %v63, %v373
    %vm532 = vcmp.eq.s32.totalorder %v63, %v376
    %vm533 = vcmp.eq.s32.totalorder %v63, %v379
    %vm534 = vcmp.eq.s32.totalorder %v63, %v382
    %vm535 = vcmp.eq.s32.totalorder %v63, %v385
    %vm536 = vcmp.eq.s32.totalorder %v63, %v388
    %vm537 = vcmp.eq.s32.totalorder %v63, %v391
    %vm538 = vcmp.eq.s32.totalorder %v63, %v394
    %vm539 = vcmp.eq.s32.totalorder %v63, %v397
    %vm540 = vcmp.eq.s32.totalorder %v63, %v400
    %vm541 = vcmp.eq.s32.totalorder %v63, %v403
    %vm542 = vcmp.eq.s32.totalorder %v63, %v406
    %vm543 = vcmp.eq.s32.totalorder %v63, %v409
    %vm544 = vcmp.eq.s32.totalorder %v63, %v412
    %vm545 = vcmp.eq.s32.totalorder %v63, %v415
    %vm546 = vcmp.eq.s32.totalorder %v63, %v418
    %vm547 = vcmp.eq.s32.totalorder %v63, %v421
    %vm548 = vcmp.eq.s32.totalorder %v63, %v424
    %vm549 = vcmp.eq.s32.totalorder %v63, %v427
    %vm550 = vcmp.eq.s32.totalorder %v63, %v430
    %vm551 = vcmp.eq.s32.totalorder %v63, %v433
    %vm552 = vcmp.eq.s32.totalorder %v63, %v436
    %vm553 = vcmp.eq.s32.totalorder %v63, %v439
    %vm554 = vcmp.eq.s32.totalorder %v63, %v442
    %vm555 = vcmp.eq.s32.totalorder %v63, %v445
    %vm556 = vcmp.eq.s32.totalorder %v63, %v448
    %vm557 = vcmp.eq.s32.totalorder %v63, %v451
    %vm558 = vcmp.eq.s32.totalorder %v63, %v454
    %vm559 = vcmp.eq.s32.totalorder %v63, %v457
    %vm560 = vcmp.eq.s32.totalorder %v63, %v460
    %vm561 = vcmp.eq.s32.totalorder %v63, %v463
    %vm562 = vcmp.eq.s32.totalorder %v63, %v466
    %vm563 = vcmp.eq.s32.totalorder %v63, %v469
    %vm564 = vcmp.eq.s32.totalorder %v63, %v472
    %vm565 = vcmp.eq.s32.totalorder %v63, %v475
    %vm566 = vcmp.eq.s32.totalorder %v63, %v478
    %vm567 = vcmp.eq.s32.totalorder %v63, %v481
    %vm568 = vcmp.eq.s32.totalorder %v63, %v484
    %vm569 = vcmp.eq.s32.totalorder %v63, %v487
    %vm570 = vcmp.eq.s32.totalorder %v63, %v490
    %vm571 = vcmp.eq.s32.totalorder %v63, %v493
    %vm572 = vcmp.eq.s32.totalorder %v63, %v496
    %vm573 = vcmp.eq.s32.totalorder %v63, %v499
    %vm574 = vcmp.eq.s32.totalorder %v63, %v502
    %vm575 = vcmp.eq.s32.totalorder %v63, %v505
    %vm576 = vcmp.eq.s32.totalorder %v63, %v508
    %vm577 = vcmp.eq.s32.totalorder %v63, %v511
    %vm578 = vcmp.eq.s32.totalorder %v63, %v514
    %vm579 = vmand %vm195, %vm515
    %vm580 = vmand %vm196, %vm516
    %vm581 = vmand %vm197, %vm517
    %vm582 = vmand %vm198, %vm518
    %vm583 = vmand %vm199, %vm519
    %vm584 = vmand %vm200, %vm520
    %vm585 = vmand %vm201, %vm521
    %vm586 = vmand %vm202, %vm522
    %vm587 = vmand %vm203, %vm523
    %vm588 = vmand %vm204, %vm524
    %vm589 = vmand %vm205, %vm525
    %vm590 = vmand %vm206, %vm526
    %vm591 = vmand %vm207, %vm527
    %vm592 = vmand %vm208, %vm528
    %vm593 = vmand %vm209, %vm529
    %vm594 = vmand %vm210, %vm530
    %vm595 = vmand %vm211, %vm531
    %vm596 = vmand %vm212, %vm532
    %vm597 = vmand %vm213, %vm533
    %vm598 = vmand %vm214, %vm534
    %vm599 = vmand %vm215, %vm535
    %vm600 = vmand %vm216, %vm536
    %vm601 = vmand %vm217, %vm537
    %vm602 = vmand %vm218, %vm538
    %vm603 = vmand %vm219, %vm539
    %vm604 = vmand %vm220, %vm540
    %vm605 = vmand %vm221, %vm541
    %vm606 = vmand %vm222, %vm542
    %vm607 = vmand %vm223, %vm543
    %vm608 = vmand %vm224, %vm544
    %vm609 = vmand %vm225, %vm545
    %vm610 = vmand %vm226, %vm546
    %vm611 = vmand %vm227, %vm547
    %vm612 = vmand %vm228, %vm548
    %vm613 = vmand %vm229, %vm549
    %vm614 = vmand %vm230, %vm550
    %vm615 = vmand %vm231, %vm551
    %vm616 = vmand %vm232, %vm552
    %vm617 = vmand %vm233, %vm553
    %vm618 = vmand %vm234, %vm554
    %vm619 = vmand %vm235, %vm555
    %vm620 = vmand %vm236, %vm556
    %vm621 = vmand %vm237, %vm557
    %vm622 = vmand %vm238, %vm558
    %vm623 = vmand %vm239, %vm559
    %vm624 = vmand %vm240, %vm560
    %vm625 = vmand %vm241, %vm561
    %vm626 = vmand %vm242, %vm562
    %vm627 = vmand %vm243, %vm563
    %vm628 = vmand %vm244, %vm564
    %vm629 = vmand %vm245, %vm565
    %vm630 = vmand %vm246, %vm566
    %vm631 = vmand %vm247, %vm567
    %vm632 = vmand %vm248, %vm568
    %vm633 = vmand %vm249, %vm569
    %vm634 = vmand %vm250, %vm570
    %vm635 = vmand %vm251, %vm571
    %vm636 = vmand %vm252, %vm572
    %vm637 = vmand %vm253, %vm573
    %vm638 = vmand %vm254, %vm574
    %vm639 = vmand %vm255, %vm575
    %vm640 = vmand %vm256, %vm576
    %vm641 = vmand %vm257, %vm577
    %vm642 = vmand %vm258, %vm578
    %v643 = vld [vmem:[#allocation2] sm:$0xff]
    %v644 = vld [vmem:[#allocation2 + $0x8] sm:$0xff]
    %v645 = vld [vmem:[#allocation2 + $0x10] sm:$0xff]
    %v646 = vld [vmem:[#allocation2 + $0x18] sm:$0xff]
    %v647 = vld [vmem:[#allocation2 + $0x20] sm:$0xff]
    %v648 = vld [vmem:[#allocation2 + $0x28] sm:$0xff]
    %v649 = vld [vmem:[#allocation2 + $0x30] sm:$0xff]
    %v650 = vld [vmem:[#allocation2 + $0x38] sm:$0xff]
    %v651 = vld [vmem:[#allocation2 + $0x40] sm:$0xff]
    %v652 = vld [vmem:[#allocation2 + $0x48] sm:$0xff]
    %v653 = vld [vmem:[#allocation2 + $0x50] sm:$0xff]
    %v654 = vld [vmem:[#allocation2 + $0x58] sm:$0xff]
    %v655 = vld [vmem:[#allocation2 + $0x60] sm:$0xff]
    %v656 = vld [vmem:[#allocation2 + $0x68] sm:$0xff]
    %v657 = vld [vmem:[#allocation2 + $0x70] sm:$0xff]
    %v658 = vld [vmem:[#allocation2 + $0x78] sm:$0xff]
    %v659 = vld [vmem:[#allocation2 + $0x80] sm:$0xff]
    %v660 = vld [vmem:[#allocation2 + $0x88] sm:$0xff]
    %v661 = vld [vmem:[#allocation2 + $0x90] sm:$0xff]
    %v662 = vld [vmem:[#allocation2 + $0x98] sm:$0xff]
    %v663 = vld [vmem:[#allocation2 + $0xa0] sm:$0xff]
    %v664 = vld [vmem:[#allocation2 + $0xa8] sm:$0xff]
    %v665 = vld [vmem:[#allocation2 + $0xb0] sm:$0xff]
    %v666 = vld [vmem:[#allocation2 + $0xb8] sm:$0xff]
    %v667 = vld [vmem:[#allocation2 + $0xc0] sm:$0xff]
    %v668 = vld [vmem:[#allocation2 + $0xc8] sm:$0xff]
    %v669 = vld [vmem:[#allocation2 + $0xd0] sm:$0xff]
    %v670 = vld [vmem:[#allocation2 + $0xd8] sm:$0xff]
    %v671 = vld [vmem:[#allocation2 + $0xe0] sm:$0xff]
    %v672 = vld [vmem:[#allocation2 + $0xe8] sm:$0xff]
    %v673 = vld [vmem:[#allocation2 + $0xf0] sm:$0xff]
    %v674 = vld [vmem:[#allocation2 + $0xf8] sm:$0xff]
    %v675 = vld [vmem:[#allocation2 + $0x100] sm:$0xff]
    %v676 = vld [vmem:[#allocation2 + $0x108] sm:$0xff]
    %v677 = vld [vmem:[#allocation2 + $0x110] sm:$0xff]
    %v678 = vld [vmem:[#allocation2 + $0x118] sm:$0xff]
    %v679 = vld [vmem:[#allocation2 + $0x120] sm:$0xff]
    %v680 = vld [vmem:[#allocation2 + $0x128] sm:$0xff]
    %v681 = vld [vmem:[#allocation2 + $0x130] sm:$0xff]
    %v682 = vld [vmem:[#allocation2 + $0x138] sm:$0xff]
    %v683 = vld [vmem:[#allocation2 + $0x140] sm:$0xff]
    %v684 = vld [vmem:[#allocation2 + $0x148] sm:$0xff]
    %v685 = vld [vmem:[#allocation2 + $0x150] sm:$0xff]
    %v686 = vld [vmem:[#allocation2 + $0x158] sm:$0xff]
    %v687 = vld [vmem:[#allocation2 + $0x160] sm:$0xff]
    %v688 = vld [vmem:[#allocation2 + $0x168] sm:$0xff]
    %v689 = vld [vmem:[#allocation2 + $0x170] sm:$0xff]
    %v690 = vld [vmem:[#allocation2 + $0x178] sm:$0xff]
    %v691 = vld [vmem:[#allocation2 + $0x180] sm:$0xff]
    %v692 = vld [vmem:[#allocation2 + $0x188] sm:$0xff]
    %v693 = vld [vmem:[#allocation2 + $0x190] sm:$0xff]
    %v694 = vld [vmem:[#allocation2 + $0x198] sm:$0xff]
    %v695 = vld [vmem:[#allocation2 + $0x1a0] sm:$0xff]
    %v696 = vld [vmem:[#allocation2 + $0x1a8] sm:$0xff]
    %v697 = vld [vmem:[#allocation2 + $0x1b0] sm:$0xff]
    %v698 = vld [vmem:[#allocation2 + $0x1b8] sm:$0xff]
    %v699 = vld [vmem:[#allocation2 + $0x1c0] sm:$0xff]
    %v700 = vld [vmem:[#allocation2 + $0x1c8] sm:$0xff]
    %v701 = vld [vmem:[#allocation2 + $0x1d0] sm:$0xff]
    %v702 = vld [vmem:[#allocation2 + $0x1d8] sm:$0xff]
    %v703 = vld [vmem:[#allocation2 + $0x1e0] sm:$0xff]
    %v704 = vld [vmem:[#allocation2 + $0x1e8] sm:$0xff]
    %v705 = vld [vmem:[#allocation2 + $0x1f0] sm:$0xff]
    %v706 = vld [vmem:[#allocation2 + $0x1f8] sm:$0xff]
    %v707 = vsel %vm579, %v643, 0.0
    %v708 = vsel %vm580, %v644, 0.0
    %v709 = vsel %vm581, %v645, 0.0
    %v710 = vsel %vm582, %v646, 0.0
    %v711 = vsel %vm583, %v647, 0.0
    %v712 = vsel %vm584, %v648, 0.0
    %v713 = vsel %vm585, %v649, 0.0
    %v714 = vsel %vm586, %v650, 0.0
    %v715 = vsel %vm587, %v651, 0.0
    %v716 = vsel %vm588, %v652, 0.0
    %v717 = vsel %vm589, %v653, 0.0
    %v718 = vsel %vm590, %v654, 0.0
    %v719 = vsel %vm591, %v655, 0.0
    %v720 = vsel %vm592, %v656, 0.0
    %v721 = vsel %vm593, %v657, 0.0
    %v722 = vsel %vm594, %v658, 0.0
    %v723 = vsel %vm595, %v659, 0.0
    %v724 = vsel %vm596, %v660, 0.0
    %v725 = vsel %vm597, %v661, 0.0
    %v726 = vsel %vm598, %v662, 0.0
    %v727 = vsel %vm599, %v663, 0.0
    %v728 = vsel %vm600, %v664, 0.0
    %v729 = vsel %vm601, %v665, 0.0
    %v730 = vsel %vm602, %v666, 0.0
    %v731 = vsel %vm603, %v667, 0.0
    %v732 = vsel %vm604, %v668, 0.0
    %v733 = vsel %vm605, %v669, 0.0
    %v734 = vsel %vm606, %v670, 0.0
    %v735 = vsel %vm607, %v671, 0.0
    %v736 = vsel %vm608, %v672, 0.0
    %v737 = vsel %vm609, %v673, 0.0
    %v738 = vsel %vm610, %v674, 0.0
    %v739 = vsel %vm611, %v675, 0.0
    %v740 = vsel %vm612, %v676, 0.0
    %v741 = vsel %vm613, %v677, 0.0
    %v742 = vsel %vm614, %v678, 0.0
    %v743 = vsel %vm615, %v679, 0.0
    %v744 = vsel %vm616, %v680, 0.0
    %v745 = vsel %vm617, %v681, 0.0
    %v746 = vsel %vm618, %v682, 0.0
    %v747 = vsel %vm619, %v683, 0.0
    %v748 = vsel %vm620, %v684, 0.0
    %v749 = vsel %vm621, %v685, 0.0
    %v750 = vsel %vm622, %v686, 0.0
    %v751 = vsel %vm623, %v687, 0.0
    %v752 = vsel %vm624, %v688, 0.0
    %v753 = vsel %vm625, %v689, 0.0
    %v754 = vsel %vm626, %v690, 0.0
    %v755 = vsel %vm627, %v691, 0.0
    %v756 = vsel %vm628, %v692, 0.0
    %v757 = vsel %vm629, %v693, 0.0
    %v758 = vsel %vm630, %v694, 0.0
    %v759 = vsel %vm631, %v695, 0.0
    %v760 = vsel %vm632, %v696, 0.0
    %v761 = vsel %vm633, %v697, 0.0
    %v762 = vsel %vm634, %v698, 0.0
    %v763 = vsel %vm635, %v699, 0.0
    %v764 = vsel %vm636, %v700, 0.0
    %v765 = vsel %vm637, %v701, 0.0
    %v766 = vsel %vm638, %v702, 0.0
    %v767 = vsel %vm639, %v703, 0.0
    %v768 = vsel %vm640, %v704, 0.0
    %v769 = vsel %vm641, %v705, 0.0
    %v770 = vsel %vm642, %v706, 0.0
    %771 = vset.pattern.permute.xlu0 1
    %772 = vperm.xlu0 %771, %v259
    %v773 = vpop.permute.xlu0 %772
    %774 = vset.pattern.permute.xlu0 1
    %775 = vperm.xlu0 %774, %v260
    %v776 = vpop.permute.xlu0 %775
    %777 = vset.pattern.permute.xlu0 1
    %778 = vperm.xlu0 %777, %v261
    %v779 = vpop.permute.xlu0 %778
    %780 = vset.pattern.permute.xlu0 1
    %781 = vperm.xlu0 %780, %v262
    %v782 = vpop.permute.xlu0 %781
    %783 = vset.pattern.permute.xlu0 1
    %784 = vperm.xlu0 %783, %v263
    %v785 = vpop.permute.xlu0 %784
    %786 = vset.pattern.permute.xlu0 1
    %787 = vperm.xlu0 %786, %v264
    %v788 = vpop.permute.xlu0 %787
    %789 = vset.pattern.permute.xlu0 1
    %790 = vperm.xlu0 %789, %v265
    %v791 = vpop.permute.xlu0 %790
    %792 = vset.pattern.permute.xlu0 1
    %793 = vperm.xlu0 %792, %v266
    %v794 = vpop.permute.xlu0 %793
    %795 = vset.pattern.permute.xlu0 1
    %796 = vperm.xlu0 %795, %v267
    %v797 = vpop.permute.xlu0 %796
    %798 = vset.pattern.permute.xlu0 1
    %799 = vperm.xlu0 %798, %v268
    %v800 = vpop.permute.xlu0 %799
    %801 = vset.pattern.permute.xlu0 1
    %802 = vperm.xlu0 %801, %v269
    %v803 = vpop.permute.xlu0 %802
    %804 = vset.pattern.permute.xlu0 1
    %805 = vperm.xlu0 %804, %v270
    %v806 = vpop.permute.xlu0 %805
    %807 = vset.pattern.permute.xlu0 1
    %808 = vperm.xlu0 %807, %v271
    %v809 = vpop.permute.xlu0 %808
    %810 = vset.pattern.permute.xlu0 1
    %811 = vperm.xlu0 %810, %v272
    %v812 = vpop.permute.xlu0 %811
    %813 = vset.pattern.permute.xlu0 1
    %814 = vperm.xlu0 %813, %v273
    %v815 = vpop.permute.xlu0 %814
    %816 = vset.pattern.permute.xlu0 1
    %817 = vperm.xlu0 %816, %v274
    %v818 = vpop.permute.xlu0 %817
    %819 = vset.pattern.permute.xlu0 1
    %820 = vperm.xlu0 %819, %v275
    %v821 = vpop.permute.xlu0 %820
    %822 = vset.pattern.permute.xlu0 1
    %823 = vperm.xlu0 %822, %v276
    %v824 = vpop.permute.xlu0 %823
    %825 = vset.pattern.permute.xlu0 1
    %826 = vperm.xlu0 %825, %v277
    %v827 = vpop.permute.xlu0 %826
    %828 = vset.pattern.permute.xlu0 1
    %829 = vperm.xlu0 %828, %v278
    %v830 = vpop.permute.xlu0 %829
    %831 = vset.pattern.permute.xlu0 1
    %832 = vperm.xlu0 %831, %v279
    %v833 = vpop.permute.xlu0 %832
    %834 = vset.pattern.permute.xlu0 1
    %835 = vperm.xlu0 %834, %v280
    %v836 = vpop.permute.xlu0 %835
    %837 = vset.pattern.permute.xlu0 1
    %838 = vperm.xlu0 %837, %v281
    %v839 = vpop.permute.xlu0 %838
    %840 = vset.pattern.permute.xlu0 1
    %841 = vperm.xlu0 %840, %v282
    %v842 = vpop.permute.xlu0 %841
    %843 = vset.pattern.permute.xlu0 1
    %844 = vperm.xlu0 %843, %v283
    %v845 = vpop.permute.xlu0 %844
    %846 = vset.pattern.permute.xlu0 1
    %847 = vperm.xlu0 %846, %v284
    %v848 = vpop.permute.xlu0 %847
    %849 = vset.pattern.permute.xlu0 1
    %850 = vperm.xlu0 %849, %v285
    %v851 = vpop.permute.xlu0 %850
    %852 = vset.pattern.permute.xlu0 1
    %853 = vperm.xlu0 %852, %v286
    %v854 = vpop.permute.xlu0 %853
    %855 = vset.pattern.permute.xlu0 1
    %856 = vperm.xlu0 %855, %v287
    %v857 = vpop.permute.xlu0 %856
    %858 = vset.pattern.permute.xlu0 1
    %859 = vperm.xlu0 %858, %v288
    %v860 = vpop.permute.xlu0 %859
    %861 = vset.pattern.permute.xlu0 1
    %862 = vperm.xlu0 %861, %v289
    %v863 = vpop.permute.xlu0 %862
    %864 = vset.pattern.permute.xlu0 1
    %865 = vperm.xlu0 %864, %v290
    %v866 = vpop.permute.xlu0 %865
    %867 = vset.pattern.permute.xlu0 1
    %868 = vperm.xlu0 %867, %v291
    %v869 = vpop.permute.xlu0 %868
    %870 = vset.pattern.permute.xlu0 1
    %871 = vperm.xlu0 %870, %v292
    %v872 = vpop.permute.xlu0 %871
    %873 = vset.pattern.permute.xlu0 1
    %874 = vperm.xlu0 %873, %v293
    %v875 = vpop.permute.xlu0 %874
    %876 = vset.pattern.permute.xlu0 1
    %877 = vperm.xlu0 %876, %v294
    %v878 = vpop.permute.xlu0 %877
    %879 = vset.pattern.permute.xlu0 1
    %880 = vperm.xlu0 %879, %v295
    %v881 = vpop.permute.xlu0 %880
    %882 = vset.pattern.permute.xlu0 1
    %883 = vperm.xlu0 %882, %v296
    %v884 = vpop.permute.xlu0 %883
    %885 = vset.pattern.permute.xlu0 1
    %886 = vperm.xlu0 %885, %v297
    %v887 = vpop.permute.xlu0 %886
    %888 = vset.pattern.permute.xlu0 1
    %889 = vperm.xlu0 %888, %v298
    %v890 = vpop.permute.xlu0 %889
    %891 = vset.pattern.permute.xlu0 1
    %892 = vperm.xlu0 %891, %v299
    %v893 = vpop.permute.xlu0 %892
    %894 = vset.pattern.permute.xlu0 1
    %895 = vperm.xlu0 %894, %v300
    %v896 = vpop.permute.xlu0 %895
    %897 = vset.pattern.permute.xlu0 1
    %898 = vperm.xlu0 %897, %v301
    %v899 = vpop.permute.xlu0 %898
    %900 = vset.pattern.permute.xlu0 1
    %901 = vperm.xlu0 %900, %v302
    %v902 = vpop.permute.xlu0 %901
    %903 = vset.pattern.permute.xlu0 1
    %904 = vperm.xlu0 %903, %v303
    %v905 = vpop.permute.xlu0 %904
    %906 = vset.pattern.permute.xlu0 1
    %907 = vperm.xlu0 %906, %v304
    %v908 = vpop.permute.xlu0 %907
    %909 = vset.pattern.permute.xlu0 1
    %910 = vperm.xlu0 %909, %v305
    %v911 = vpop.permute.xlu0 %910
    %912 = vset.pattern.permute.xlu0 1
    %913 = vperm.xlu0 %912, %v306
    %v914 = vpop.permute.xlu0 %913
    %915 = vset.pattern.permute.xlu0 1
    %916 = vperm.xlu0 %915, %v307
    %v917 = vpop.permute.xlu0 %916
    %918 = vset.pattern.permute.xlu0 1
    %919 = vperm.xlu0 %918, %v308
    %v920 = vpop.permute.xlu0 %919
    %921 = vset.pattern.permute.xlu0 1
    %922 = vperm.xlu0 %921, %v309
    %v923 = vpop.permute.xlu0 %922
    %924 = vset.pattern.permute.xlu0 1
    %925 = vperm.xlu0 %924, %v310
    %v926 = vpop.permute.xlu0 %925
    %927 = vset.pattern.permute.xlu0 1
    %928 = vperm.xlu0 %927, %v311
    %v929 = vpop.permute.xlu0 %928
    %930 = vset.pattern.permute.xlu0 1
    %931 = vperm.xlu0 %930, %v312
    %v932 = vpop.permute.xlu0 %931
    %933 = vset.pattern.permute.xlu0 1
    %934 = vperm.xlu0 %933, %v313
    %v935 = vpop.permute.xlu0 %934
    %936 = vset.pattern.permute.xlu0 1
    %937 = vperm.xlu0 %936, %v314
    %v938 = vpop.permute.xlu0 %937
    %939 = vset.pattern.permute.xlu0 1
    %940 = vperm.xlu0 %939, %v315
    %v941 = vpop.permute.xlu0 %940
    %942 = vset.pattern.permute.xlu0 1
    %943 = vperm.xlu0 %942, %v316
    %v944 = vpop.permute.xlu0 %943
    %945 = vset.pattern.permute.xlu0 1
    %946 = vperm.xlu0 %945, %v317
    %v947 = vpop.permute.xlu0 %946
    %948 = vset.pattern.permute.xlu0 1
    %949 = vperm.xlu0 %948, %v318
    %v950 = vpop.permute.xlu0 %949
    %951 = vset.pattern.permute.xlu0 1
    %952 = vperm.xlu0 %951, %v319
    %v953 = vpop.permute.xlu0 %952
    %954 = vset.pattern.permute.xlu0 1
    %955 = vperm.xlu0 %954, %v320
    %v956 = vpop.permute.xlu0 %955
    %957 = vset.pattern.permute.xlu0 1
    %958 = vperm.xlu0 %957, %v321
    %v959 = vpop.permute.xlu0 %958
    %960 = vset.pattern.permute.xlu0 1
    %961 = vperm.xlu0 %960, %v322
    %v962 = vpop.permute.xlu0 %961
    %vm963 = vcmp.eq.s32.totalorder %v63, %v773
    %vm964 = vcmp.eq.s32.totalorder %v63, %v776
    %vm965 = vcmp.eq.s32.totalorder %v63, %v779
    %vm966 = vcmp.eq.s32.totalorder %v63, %v782
    %vm967 = vcmp.eq.s32.totalorder %v63, %v785
    %vm968 = vcmp.eq.s32.totalorder %v63, %v788
    %vm969 = vcmp.eq.s32.totalorder %v63, %v791
    %vm970 = vcmp.eq.s32.totalorder %v63, %v794
    %vm971 = vcmp.eq.s32.totalorder %v63, %v797
    %vm972 = vcmp.eq.s32.totalorder %v63, %v800
    %vm973 = vcmp.eq.s32.totalorder %v63, %v803
    %vm974 = vcmp.eq.s32.totalorder %v63, %v806
    %vm975 = vcmp.eq.s32.totalorder %v63, %v809
    %vm976 = vcmp.eq.s32.totalorder %v63, %v812
    %vm977 = vcmp.eq.s32.totalorder %v63, %v815
    %vm978 = vcmp.eq.s32.totalorder %v63, %v818
    %vm979 = vcmp.eq.s32.totalorder %v63, %v821
    %vm980 = vcmp.eq.s32.totalorder %v63, %v824
    %vm981 = vcmp.eq.s32.totalorder %v63, %v827
    %vm982 = vcmp.eq.s32.totalorder %v63, %v830
    %vm983 = vcmp.eq.s32.totalorder %v63, %v833
    %vm984 = vcmp.eq.s32.totalorder %v63, %v836
    %vm985 = vcmp.eq.s32.totalorder %v63, %v839
    %vm986 = vcmp.eq.s32.totalorder %v63, %v842
    %vm987 = vcmp.eq.s32.totalorder %v63, %v845
    %vm988 = vcmp.eq.s32.totalorder %v63, %v848
    %vm989 = vcmp.eq.s32.totalorder %v63, %v851
    %vm990 = vcmp.eq.s32.totalorder %v63, %v854
    %vm991 = vcmp.eq.s32.totalorder %v63, %v857
    %vm992 = vcmp.eq.s32.totalorder %v63, %v860
    %vm993 = vcmp.eq.s32.totalorder %v63, %v863
    %vm994 = vcmp.eq.s32.totalorder %v63, %v866
    %vm995 = vcmp.eq.s32.totalorder %v63, %v869
    %vm996 = vcmp.eq.s32.totalorder %v63, %v872
    %vm997 = vcmp.eq.s32.totalorder %v63, %v875
    %vm998 = vcmp.eq.s32.totalorder %v63, %v878
    %vm999 = vcmp.eq.s32.totalorder %v63, %v881
    %vm1000 = vcmp.eq.s32.totalorder %v63, %v884
    %vm1001 = vcmp.eq.s32.totalorder %v63, %v887
    %vm1002 = vcmp.eq.s32.totalorder %v63, %v890
    %vm1003 = vcmp.eq.s32.totalorder %v63, %v893
    %vm1004 = vcmp.eq.s32.totalorder %v63, %v896
    %vm1005 = vcmp.eq.s32.totalorder %v63, %v899
    %vm1006 = vcmp.eq.s32.totalorder %v63, %v902
    %vm1007 = vcmp.eq.s32.totalorder %v63, %v905
    %vm1008 = vcmp.eq.s32.totalorder %v63, %v908
    %vm1009 = vcmp.eq.s32.totalorder %v63, %v911
    %vm1010 = vcmp.eq.s32.totalorder %v63, %v914
    %vm1011 = vcmp.eq.s32.totalorder %v63, %v917
    %vm1012 = vcmp.eq.s32.totalorder %v63, %v920
    %vm1013 = vcmp.eq.s32.totalorder %v63, %v923
    %vm1014 = vcmp.eq.s32.totalorder %v63, %v926
    %vm1015 = vcmp.eq.s32.totalorder %v63, %v929
    %vm1016 = vcmp.eq.s32.totalorder %v63, %v932
    %vm1017 = vcmp.eq.s32.totalorder %v63, %v935
    %vm1018 = vcmp.eq.s32.totalorder %v63, %v938
    %vm1019 = vcmp.eq.s32.totalorder %v63, %v941
    %vm1020 = vcmp.eq.s32.totalorder %v63, %v944
    %vm1021 = vcmp.eq.s32.totalorder %v63, %v947
    %vm1022 = vcmp.eq.s32.totalorder %v63, %v950
    %vm1023 = vcmp.eq.s32.totalorder %v63, %v953
    %vm1024 = vcmp.eq.s32.totalorder %v63, %v956
    %vm1025 = vcmp.eq.s32.totalorder %v63, %v959
    %vm1026 = vcmp.eq.s32.totalorder %v63, %v962
    %vm1027 = vmand %vm195, %vm963
    %vm1028 = vmand %vm196, %vm964
    %vm1029 = vmand %vm197, %vm965
    %vm1030 = vmand %vm198, %vm966
    %vm1031 = vmand %vm199, %vm967
    %vm1032 = vmand %vm200, %vm968
    %vm1033 = vmand %vm201, %vm969
    %vm1034 = vmand %vm202, %vm970
    %vm1035 = vmand %vm203, %vm971
    %vm1036 = vmand %vm204, %vm972
    %vm1037 = vmand %vm205, %vm973
    %vm1038 = vmand %vm206, %vm974
    %vm1039 = vmand %vm207, %vm975
    %vm1040 = vmand %vm208, %vm976
    %vm1041 = vmand %vm209, %vm977
    %vm1042 = vmand %vm210, %vm978
    %vm1043 = vmand %vm211, %vm979
    %vm1044 = vmand %vm212, %vm980
    %vm1045 = vmand %vm213, %vm981
    %vm1046 = vmand %vm214, %vm982
    %vm1047 = vmand %vm215, %vm983
    %vm1048 = vmand %vm216, %vm984
    %vm1049 = vmand %vm217, %vm985
    %vm1050 = vmand %vm218, %vm986
    %vm1051 = vmand %vm219, %vm987
    %vm1052 = vmand %vm220, %vm988
    %vm1053 = vmand %vm221, %vm989
    %vm1054 = vmand %vm222, %vm990
    %vm1055 = vmand %vm223, %vm991
    %vm1056 = vmand %vm224, %vm992
    %vm1057 = vmand %vm225, %vm993
    %vm1058 = vmand %vm226, %vm994
    %vm1059 = vmand %vm227, %vm995
    %vm1060 = vmand %vm228, %vm996
    %vm1061 = vmand %vm229, %vm997
    %vm1062 = vmand %vm230, %vm998
    %vm1063 = vmand %vm231, %vm999
    %vm1064 = vmand %vm232, %vm1000
    %vm1065 = vmand %vm233, %vm1001
    %vm1066 = vmand %vm234, %vm1002
    %vm1067 = vmand %vm235, %vm1003
    %vm1068 = vmand %vm236, %vm1004
    %vm1069 = vmand %vm237, %vm1005
    %vm1070 = vmand %vm238, %vm1006
    %vm1071 = vmand %vm239, %vm1007
    %vm1072 = vmand %vm240, %vm1008
    %vm1073 = vmand %vm241, %vm1009
    %vm1074 = vmand %vm242, %vm1010
    %vm1075 = vmand %vm243, %vm1011
    %vm1076 = vmand %vm244, %vm1012
    %vm1077 = vmand %vm245, %vm1013
    %vm1078 = vmand %vm246, %vm1014
    %vm1079 = vmand %vm247, %vm1015
    %vm1080 = vmand %vm248, %vm1016
    %vm1081 = vmand %vm249, %vm1017
    %vm1082 = vmand %vm250, %vm1018
    %vm1083 = vmand %vm251, %vm1019
    %vm1084 = vmand %vm252, %vm1020
    %vm1085 = vmand %vm253, %vm1021
    %vm1086 = vmand %vm254, %vm1022
    %vm1087 = vmand %vm255, %vm1023
    %vm1088 = vmand %vm256, %vm1024
    %vm1089 = vmand %vm257, %vm1025
    %vm1090 = vmand %vm258, %vm1026
    %v1091 = vld [vmem:[#allocation5] sm:$0xff]
    %v1092 = vld [vmem:[#allocation5 + $0x8] sm:$0xff]
    %v1093 = vld [vmem:[#allocation5 + $0x10] sm:$0xff]
    %v1094 = vld [vmem:[#allocation5 + $0x18] sm:$0xff]
    %v1095 = vld [vmem:[#allocation5 + $0x20] sm:$0xff]
    %v1096 = vld [vmem:[#allocation5 + $0x28] sm:$0xff]
    %v1097 = vld [vmem:[#allocation5 + $0x30] sm:$0xff]
    %v1098 = vld [vmem:[#allocation5 + $0x38] sm:$0xff]
    %v1099 = vld [vmem:[#allocation5 + $0x40] sm:$0xff]
    %v1100 = vld [vmem:[#allocation5 + $0x48] sm:$0xff]
    %v1101 = vld [vmem:[#allocation5 + $0x50] sm:$0xff]
    %v1102 = vld [vmem:[#allocation5 + $0x58] sm:$0xff]
    %v1103 = vld [vmem:[#allocation5 + $0x60] sm:$0xff]
    %v1104 = vld [vmem:[#allocation5 + $0x68] sm:$0xff]
    %v1105 = vld [vmem:[#allocation5 + $0x70] sm:$0xff]
    %v1106 = vld [vmem:[#allocation5 + $0x78] sm:$0xff]
    %v1107 = vld [vmem:[#allocation5 + $0x80] sm:$0xff]
    %v1108 = vld [vmem:[#allocation5 + $0x88] sm:$0xff]
    %v1109 = vld [vmem:[#allocation5 + $0x90] sm:$0xff]
    %v1110 = vld [vmem:[#allocation5 + $0x98] sm:$0xff]
    %v1111 = vld [vmem:[#allocation5 + $0xa0] sm:$0xff]
    %v1112 = vld [vmem:[#allocation5 + $0xa8] sm:$0xff]
    %v1113 = vld [vmem:[#allocation5 + $0xb0] sm:$0xff]
    %v1114 = vld [vmem:[#allocation5 + $0xb8] sm:$0xff]
    %v1115 = vld [vmem:[#allocation5 + $0xc0] sm:$0xff]
    %v1116 = vld [vmem:[#allocation5 + $0xc8] sm:$0xff]
    %v1117 = vld [vmem:[#allocation5 + $0xd0] sm:$0xff]
    %v1118 = vld [vmem:[#allocation5 + $0xd8] sm:$0xff]
    %v1119 = vld [vmem:[#allocation5 + $0xe0] sm:$0xff]
    %v1120 = vld [vmem:[#allocation5 + $0xe8] sm:$0xff]
    %v1121 = vld [vmem:[#allocation5 + $0xf0] sm:$0xff]
    %v1122 = vld [vmem:[#allocation5 + $0xf8] sm:$0xff]
    %v1123 = vld [vmem:[#allocation5 + $0x100] sm:$0xff]
    %v1124 = vld [vmem:[#allocation5 + $0x108] sm:$0xff]
    %v1125 = vld [vmem:[#allocation5 + $0x110] sm:$0xff]
    %v1126 = vld [vmem:[#allocation5 + $0x118] sm:$0xff]
    %v1127 = vld [vmem:[#allocation5 + $0x120] sm:$0xff]
    %v1128 = vld [vmem:[#allocation5 + $0x128] sm:$0xff]
    %v1129 = vld [vmem:[#allocation5 + $0x130] sm:$0xff]
    %v1130 = vld [vmem:[#allocation5 + $0x138] sm:$0xff]
    %v1131 = vld [vmem:[#allocation5 + $0x140] sm:$0xff]
    %v1132 = vld [vmem:[#allocation5 + $0x148] sm:$0xff]
    %v1133 = vld [vmem:[#allocation5 + $0x150] sm:$0xff]
    %v1134 = vld [vmem:[#allocation5 + $0x158] sm:$0xff]
    %v1135 = vld [vmem:[#allocation5 + $0x160] sm:$0xff]
    %v1136 = vld [vmem:[#allocation5 + $0x168] sm:$0xff]
    %v1137 = vld [vmem:[#allocation5 + $0x170] sm:$0xff]
    %v1138 = vld [vmem:[#allocation5 + $0x178] sm:$0xff]
    %v1139 = vld [vmem:[#allocation5 + $0x180] sm:$0xff]
    %v1140 = vld [vmem:[#allocation5 + $0x188] sm:$0xff]
    %v1141 = vld [vmem:[#allocation5 + $0x190] sm:$0xff]
    %v1142 = vld [vmem:[#allocation5 + $0x198] sm:$0xff]
    %v1143 = vld [vmem:[#allocation5 + $0x1a0] sm:$0xff]
    %v1144 = vld [vmem:[#allocation5 + $0x1a8] sm:$0xff]
    %v1145 = vld [vmem:[#allocation5 + $0x1b0] sm:$0xff]
    %v1146 = vld [vmem:[#allocation5 + $0x1b8] sm:$0xff]
    %v1147 = vld [vmem:[#allocation5 + $0x1c0] sm:$0xff]
    %v1148 = vld [vmem:[#allocation5 + $0x1c8] sm:$0xff]
    %v1149 = vld [vmem:[#allocation5 + $0x1d0] sm:$0xff]
    %v1150 = vld [vmem:[#allocation5 + $0x1d8] sm:$0xff]
    %v1151 = vld [vmem:[#allocation5 + $0x1e0] sm:$0xff]
    %v1152 = vld [vmem:[#allocation5 + $0x1e8] sm:$0xff]
    %v1153 = vld [vmem:[#allocation5 + $0x1f0] sm:$0xff]
    %v1154 = vld [vmem:[#allocation5 + $0x1f8] sm:$0xff]
    %v1155 = vsel %vm1027, %v1091, 0.0
    %v1156 = vsel %vm1028, %v1092, 0.0
    %v1157 = vsel %vm1029, %v1093, 0.0
    %v1158 = vsel %vm1030, %v1094, 0.0
    %v1159 = vsel %vm1031, %v1095, 0.0
    %v1160 = vsel %vm1032, %v1096, 0.0
    %v1161 = vsel %vm1033, %v1097, 0.0
    %v1162 = vsel %vm1034, %v1098, 0.0
    %v1163 = vsel %vm1035, %v1099, 0.0
    %v1164 = vsel %vm1036, %v1100, 0.0
    %v1165 = vsel %vm1037, %v1101, 0.0
    %v1166 = vsel %vm1038, %v1102, 0.0
    %v1167 = vsel %vm1039, %v1103, 0.0
    %v1168 = vsel %vm1040, %v1104, 0.0
    %v1169 = vsel %vm1041, %v1105, 0.0
    %v1170 = vsel %vm1042, %v1106, 0.0
    %v1171 = vsel %vm1043, %v1107, 0.0
    %v1172 = vsel %vm1044, %v1108, 0.0
    %v1173 = vsel %vm1045, %v1109, 0.0
    %v1174 = vsel %vm1046, %v1110, 0.0
    %v1175 = vsel %vm1047, %v1111, 0.0
    %v1176 = vsel %vm1048, %v1112, 0.0
    %v1177 = vsel %vm1049, %v1113, 0.0
    %v1178 = vsel %vm1050, %v1114, 0.0
    %v1179 = vsel %vm1051, %v1115, 0.0
    %v1180 = vsel %vm1052, %v1116, 0.0
    %v1181 = vsel %vm1053, %v1117, 0.0
    %v1182 = vsel %vm1054, %v1118, 0.0
    %v1183 = vsel %vm1055, %v1119, 0.0
    %v1184 = vsel %vm1056, %v1120, 0.0
    %v1185 = vsel %vm1057, %v1121, 0.0
    %v1186 = vsel %vm1058, %v1122, 0.0
    %v1187 = vsel %vm1059, %v1123, 0.0
    %v1188 = vsel %vm1060, %v1124, 0.0
    %v1189 = vsel %vm1061, %v1125, 0.0
    %v1190 = vsel %vm1062, %v1126, 0.0
    %v1191 = vsel %vm1063, %v1127, 0.0
    %v1192 = vsel %vm1064, %v1128, 0.0
    %v1193 = vsel %vm1065, %v1129, 0.0
    %v1194 = vsel %vm1066, %v1130, 0.0
    %v1195 = vsel %vm1067, %v1131, 0.0
    %v1196 = vsel %vm1068, %v1132, 0.0
    %v1197 = vsel %vm1069, %v1133, 0.0
    %v1198 = vsel %vm1070, %v1134, 0.0
    %v1199 = vsel %vm1071, %v1135, 0.0
    %v1200 = vsel %vm1072, %v1136, 0.0
    %v1201 = vsel %vm1073, %v1137, 0.0
    %v1202 = vsel %vm1074, %v1138, 0.0
    %v1203 = vsel %vm1075, %v1139, 0.0
    %v1204 = vsel %vm1076, %v1140, 0.0
    %v1205 = vsel %vm1077, %v1141, 0.0
    %v1206 = vsel %vm1078, %v1142, 0.0
    %v1207 = vsel %vm1079, %v1143, 0.0
    %v1208 = vsel %vm1080, %v1144, 0.0
    %v1209 = vsel %vm1081, %v1145, 0.0
    %v1210 = vsel %vm1082, %v1146, 0.0
    %v1211 = vsel %vm1083, %v1147, 0.0
    %v1212 = vsel %vm1084, %v1148, 0.0
    %v1213 = vsel %vm1085, %v1149, 0.0
    %v1214 = vsel %vm1086, %v1150, 0.0
    %v1215 = vsel %vm1087, %v1151, 0.0
    %v1216 = vsel %vm1088, %v1152, 0.0
    %v1217 = vsel %vm1089, %v1153, 0.0
    %v1218 = vsel %vm1090, %v1154, 0.0
    %v1219 = vadd.f32 %v707, %v1155
    %v1220 = vadd.f32 %v708, %v1156
    %v1221 = vadd.f32 %v709, %v1157
    %v1222 = vadd.f32 %v710, %v1158
    %v1223 = vadd.f32 %v711, %v1159
    %v1224 = vadd.f32 %v712, %v1160
    %v1225 = vadd.f32 %v713, %v1161
    %v1226 = vadd.f32 %v714, %v1162
    %v1227 = vadd.f32 %v715, %v1163
    %v1228 = vadd.f32 %v716, %v1164
    %v1229 = vadd.f32 %v717, %v1165
    %v1230 = vadd.f32 %v718, %v1166
    %v1231 = vadd.f32 %v719, %v1167
    %v1232 = vadd.f32 %v720, %v1168
    %v1233 = vadd.f32 %v721, %v1169
    %v1234 = vadd.f32 %v722, %v1170
    %v1235 = vadd.f32 %v723, %v1171
    %v1236 = vadd.f32 %v724, %v1172
    %v1237 = vadd.f32 %v725, %v1173
    %v1238 = vadd.f32 %v726, %v1174
    %v1239 = vadd.f32 %v727, %v1175
    %v1240 = vadd.f32 %v728, %v1176
    %v1241 = vadd.f32 %v729, %v1177
    %v1242 = vadd.f32 %v730, %v1178
    %v1243 = vadd.f32 %v731, %v1179
    %v1244 = vadd.f32 %v732, %v1180
    %v1245 = vadd.f32 %v733, %v1181
    %v1246 = vadd.f32 %v734, %v1182
    %v1247 = vadd.f32 %v735, %v1183
    %v1248 = vadd.f32 %v736, %v1184
    %v1249 = vadd.f32 %v737, %v1185
    %v1250 = vadd.f32 %v738, %v1186
    %v1251 = vadd.f32 %v739, %v1187
    %v1252 = vadd.f32 %v740, %v1188
    %v1253 = vadd.f32 %v741, %v1189
    %v1254 = vadd.f32 %v742, %v1190
    %v1255 = vadd.f32 %v743, %v1191
    %v1256 = vadd.f32 %v744, %v1192
    %v1257 = vadd.f32 %v745, %v1193
    %v1258 = vadd.f32 %v746, %v1194
    %v1259 = vadd.f32 %v747, %v1195
    %v1260 = vadd.f32 %v748, %v1196
    %v1261 = vadd.f32 %v749, %v1197
    %v1262 = vadd.f32 %v750, %v1198
    %v1263 = vadd.f32 %v751, %v1199
    %v1264 = vadd.f32 %v752, %v1200
    %v1265 = vadd.f32 %v753, %v1201
    %v1266 = vadd.f32 %v754, %v1202
    %v1267 = vadd.f32 %v755, %v1203
    %v1268 = vadd.f32 %v756, %v1204
    %v1269 = vadd.f32 %v757, %v1205
    %v1270 = vadd.f32 %v758, %v1206
    %v1271 = vadd.f32 %v759, %v1207
    %v1272 = vadd.f32 %v760, %v1208
    %v1273 = vadd.f32 %v761, %v1209
    %v1274 = vadd.f32 %v762, %v1210
    %v1275 = vadd.f32 %v763, %v1211
    %v1276 = vadd.f32 %v764, %v1212
    %v1277 = vadd.f32 %v765, %v1213
    %v1278 = vadd.f32 %v766, %v1214
    %v1279 = vadd.f32 %v767, %v1215
    %v1280 = vadd.f32 %v768, %v1216
    %v1281 = vadd.f32 %v769, %v1217
    %v1282 = vadd.f32 %v770, %v1218
    %vm1283 = vcmask 130048
    %v1284 = vsel %vm1283, %v1219, 0.0
    %v1285 = vsel %vm1283, %v1220, 0.0
    %v1286 = vadd.f32 %v1284, %v1285
    %v1287 = vsel %vm1283, %v1221, 0.0
    %v1288 = vadd.f32 %v1286, %v1287
    %v1289 = vsel %vm1283, %v1222, 0.0
    %v1290 = vadd.f32 %v1288, %v1289
    %v1291 = vsel %vm1283, %v1223, 0.0
    %v1292 = vadd.f32 %v1290, %v1291
    %v1293 = vsel %vm1283, %v1224, 0.0
    %v1294 = vadd.f32 %v1292, %v1293
    %v1295 = vsel %vm1283, %v1225, 0.0
    %v1296 = vadd.f32 %v1294, %v1295
    %v1297 = vsel %vm1283, %v1226, 0.0
    %v1298 = vadd.f32 %v1296, %v1297
    %v1299 = vsel %vm1283, %v1227, 0.0
    %v1300 = vadd.f32 %v1298, %v1299
    %v1301 = vsel %vm1283, %v1228, 0.0
    %v1302 = vadd.f32 %v1300, %v1301
    %v1303 = vsel %vm1283, %v1229, 0.0
    %v1304 = vadd.f32 %v1302, %v1303
    %v1305 = vsel %vm1283, %v1230, 0.0
    %v1306 = vadd.f32 %v1304, %v1305
    %v1307 = vsel %vm1283, %v1231, 0.0
    %v1308 = vadd.f32 %v1306, %v1307
    %v1309 = vsel %vm1283, %v1232, 0.0
    %v1310 = vadd.f32 %v1308, %v1309
    %v1311 = vsel %vm1283, %v1233, 0.0
    %v1312 = vadd.f32 %v1310, %v1311
    %v1313 = vsel %vm1283, %v1234, 0.0
    %v1314 = vadd.f32 %v1312, %v1313
    %v1315 = vsel %vm1283, %v1235, 0.0
    %v1316 = vadd.f32 %v1314, %v1315
    %v1317 = vsel %vm1283, %v1236, 0.0
    %v1318 = vadd.f32 %v1316, %v1317
    %v1319 = vsel %vm1283, %v1237, 0.0
    %v1320 = vadd.f32 %v1318, %v1319
    %v1321 = vsel %vm1283, %v1238, 0.0
    %v1322 = vadd.f32 %v1320, %v1321
    %v1323 = vsel %vm1283, %v1239, 0.0
    %v1324 = vadd.f32 %v1322, %v1323
    %v1325 = vsel %vm1283, %v1240, 0.0
    %v1326 = vadd.f32 %v1324, %v1325
    %v1327 = vsel %vm1283, %v1241, 0.0
    %v1328 = vadd.f32 %v1326, %v1327
    %v1329 = vsel %vm1283, %v1242, 0.0
    %v1330 = vadd.f32 %v1328, %v1329
    %v1331 = vsel %vm1283, %v1243, 0.0
    %v1332 = vadd.f32 %v1330, %v1331
    %v1333 = vsel %vm1283, %v1244, 0.0
    %v1334 = vadd.f32 %v1332, %v1333
    %v1335 = vsel %vm1283, %v1245, 0.0
    %v1336 = vadd.f32 %v1334, %v1335
    %v1337 = vsel %vm1283, %v1246, 0.0
    %v1338 = vadd.f32 %v1336, %v1337
    %v1339 = vsel %vm1283, %v1247, 0.0
    %v1340 = vadd.f32 %v1338, %v1339
    %v1341 = vsel %vm1283, %v1248, 0.0
    %v1342 = vadd.f32 %v1340, %v1341
    %v1343 = vsel %vm1283, %v1249, 0.0
    %v1344 = vadd.f32 %v1342, %v1343
    %v1345 = vsel %vm1283, %v1250, 0.0
    %v1346 = vadd.f32 %v1344, %v1345
    %v1347 = vsel %vm1283, %v1251, 0.0
    %v1348 = vadd.f32 %v1346, %v1347
    %v1349 = vsel %vm1283, %v1252, 0.0
    %v1350 = vadd.f32 %v1348, %v1349
    %v1351 = vsel %vm1283, %v1253, 0.0
    %v1352 = vadd.f32 %v1350, %v1351
    %v1353 = vsel %vm1283, %v1254, 0.0
    %v1354 = vadd.f32 %v1352, %v1353
    %v1355 = vsel %vm1283, %v1255, 0.0
    %v1356 = vadd.f32 %v1354, %v1355
    %v1357 = vsel %vm1283, %v1256, 0.0
    %v1358 = vadd.f32 %v1356, %v1357
    %v1359 = vsel %vm1283, %v1257, 0.0
    %v1360 = vadd.f32 %v1358, %v1359
    %v1361 = vsel %vm1283, %v1258, 0.0
    %v1362 = vadd.f32 %v1360, %v1361
    %v1363 = vsel %vm1283, %v1259, 0.0
    %v1364 = vadd.f32 %v1362, %v1363
    %v1365 = vsel %vm1283, %v1260, 0.0
    %v1366 = vadd.f32 %v1364, %v1365
    %v1367 = vsel %vm1283, %v1261, 0.0
    %v1368 = vadd.f32 %v1366, %v1367
    %v1369 = vsel %vm1283, %v1262, 0.0
    %v1370 = vadd.f32 %v1368, %v1369
    %v1371 = vsel %vm1283, %v1263, 0.0
    %v1372 = vadd.f32 %v1370, %v1371
    %v1373 = vsel %vm1283, %v1264, 0.0
    %v1374 = vadd.f32 %v1372, %v1373
    %v1375 = vsel %vm1283, %v1265, 0.0
    %v1376 = vadd.f32 %v1374, %v1375
    %v1377 = vsel %vm1283, %v1266, 0.0
    %v1378 = vadd.f32 %v1376, %v1377
    %v1379 = vsel %vm1283, %v1267, 0.0
    %v1380 = vadd.f32 %v1378, %v1379
    %v1381 = vsel %vm1283, %v1268, 0.0
    %v1382 = vadd.f32 %v1380, %v1381
    %v1383 = vsel %vm1283, %v1269, 0.0
    %v1384 = vadd.f32 %v1382, %v1383
    %v1385 = vsel %vm1283, %v1270, 0.0
    %v1386 = vadd.f32 %v1384, %v1385
    %v1387 = vsel %vm1283, %v1271, 0.0
    %v1388 = vadd.f32 %v1386, %v1387
    %v1389 = vsel %vm1283, %v1272, 0.0
    %v1390 = vadd.f32 %v1388, %v1389
    %v1391 = vsel %vm1283, %v1273, 0.0
    %v1392 = vadd.f32 %v1390, %v1391
    %v1393 = vsel %vm1283, %v1274, 0.0
    %v1394 = vadd.f32 %v1392, %v1393
    %v1395 = vsel %vm1283, %v1275, 0.0
    %v1396 = vadd.f32 %v1394, %v1395
    %v1397 = vsel %vm1283, %v1276, 0.0
    %v1398 = vadd.f32 %v1396, %v1397
    %v1399 = vsel %vm1283, %v1277, 0.0
    %v1400 = vadd.f32 %v1398, %v1399
    %v1401 = vsel %vm1283, %v1278, 0.0
    %v1402 = vadd.f32 %v1400, %v1401
    %v1403 = vsel %vm1283, %v1279, 0.0
    %v1404 = vadd.f32 %v1402, %v1403
    %v1405 = vsel %vm1283, %v1280, 0.0
    %v1406 = vadd.f32 %v1404, %v1405
    %v1407 = vsel %vm1283, %v1281, 0.0
    %v1408 = vadd.f32 %v1406, %v1407
    %v1409 = vsel %vm1283, %v1282, 0.0
    %v1410 = vadd.f32 %v1408, %v1409
    %1411 = vadd.xlane.f32.xlu0 %v1410
    %v1412 = vpop.xlane.xlu0 %1411
    %v1413 = vrot.slane %v1412, 4
    %v1414 = vadd.f32 %v1412, %v1413
    %v1415 = vrot.slane %v1414, 2
    %v1416 = vadd.f32 %v1414, %v1415
    %v1417 = vrot.slane %v1416, 1
    %v1418 = vadd.f32 %v1416, %v1417
    %s1419 = vtos %v1418
    %s1420 = ssub.f32 0.0, %s1419
    %s1421 = scalar_lea.smem [#allocation8], 0
    %1422 = sst [smem:[%s1421]] %s1420
    // Predicated region
    $region26: #{tpu_custom_call.1} parent=1 // pred_check
      _
    $region27: #{tpu_custom_call.1} parent=1 // pred_check_branch
      %1424 = sbr.rel (0) target = $region29
    $region28: #{tpu_custom_call.1} parent=1 // pred_region
      %1426 = vsyncadd [#allocation4], 0
      %s1428 = sshll.u32 %s3, 4
      %s1429 = int_to_ptr.hbm [resolvable:$true] %s1428
      %1431 = dma.smem_to_hbm [#allocation8], 16, %s1429, [#allocation4]
    $region29: #{tpu_custom_call.1} parent=1 // pred_fallthru
      _
    // Predicated region
    $region30: #{tpu_custom_call.1} parent=1 // pred_check
      _
    $region31: #{tpu_custom_call.1} parent=1 // pred_check_branch
      %1433 = sbr.rel (0) target = $region33
    $region32: #{tpu_custom_call.1} parent=1 // pred_region
      %1435 = dma.done [#allocation4], 16
    $region33: #{tpu_custom_call.1} parent=1 // pred_fallthru
      _
    %1436 = sfence
    %1437 = vsyncpa [#allocation3], 1
    %1438 = vsyncpa [#allocation6], 1
    %1439 = vsyncpa [#allocation4], 1

</llo_original>
